<compile_context>
chip_gen: v7x
topology: tpu7x:2x2x1
jax: 0.10.0
libtpu: 0.0.40
codegen_flags: <defaults>
</compile_context>

<pallas_src>
import functools

import jax
import jax.numpy as jnp
from jax.experimental import pallas as pl
from jax.experimental.pallas import tpu as pltpu

_LANES = 128
_SUBLANES = 8
_BLOCK_ELEMS = _SUBLANES * _LANES              # 1024-element alignment unit
_FUSED_MAX_BYTES = 4 * 1024 * 1024             # fused path cap (safe on v5e/v6e/v7x)
_TILE_ROW_CANDIDATES = (1024, 512, 256, 128, 64, 32, 16, 8)


# ---------------------------------------------------------------------------
# Fused single-pass kernel: whole slab in VMEM, reduce + normalize in one go.
# ---------------------------------------------------------------------------
def _fused_kernel(x_ref, o_ref):
    x = x_ref[...]
    mn = jnp.min(x)
    rng = jnp.max(x) - mn
    # Exact reciprocal (1e-6 tolerance); scale = 0 reproduces the zeros branch
    # because (x - mn) == 0 whenever rng == 0.
    scale = jnp.where(rng > 0.0, 1.0 / rng, 0.0)
    o_ref[...] = (x - mn) * scale


# ---------------------------------------------------------------------------
# Two-pass path, kernel 1: vector min/max accumulation.
# Grid = (splits, tiles_per_split); the (1, 8, 128) output blocks stay resident
# across the inner ("arbitrary") axis and act as per-split VPU accumulators.
# ---------------------------------------------------------------------------
def _minmax_kernel(x_ref, min_ref, max_ref):
    i = pl.program_id(1)

    @pl.when(i == 0)
    def _():
        min_ref[...] = jnp.full(min_ref.shape, jnp.inf, jnp.float32)
        max_ref[...] = jnp.full(max_ref.shape, -jnp.inf, jnp.float32)

    x = x_ref[...]                                            # (tile_rows, 128)
    # Fold to (tile_rows/8, 8, 128): reshape stays within (8,128) tile
    # boundaries, so it is layout-free; the axis-0 reduce is pure VPU work.
    x3 = x.reshape(x.shape[0] // _SUBLANES, _SUBLANES, _LANES)
    min_ref[...] = jnp.minimum(min_ref[...], jnp.min(x3, axis=0, keepdims=True))
    max_ref[...] = jnp.maximum(max_ref[...], jnp.max(x3, axis=0, keepdims=True))


# ---------------------------------------------------------------------------
# Two-pass path, kernel 2: elementwise normalize with precomputed (mn, scale).
# ---------------------------------------------------------------------------
def _normalize_kernel(ms_ref, x_ref, o_ref):
    mn = ms_ref[0]
    scale = ms_ref[1]
    o_ref[...] = (x_ref[...] - mn) * scale


# ---------------------------------------------------------------------------
# Wrapper
# ---------------------------------------------------------------------------
def _pick_tile_rows(rows):
    for cand in _TILE_ROW_CANDIDATES:
        if rows % cand == 0:
            return cand
    return _SUBLANES  # unreachable: rows is always a multiple of 8


@functools.partial(jax.jit, static_argnames=("fused_max_bytes",))
def _minmax_normalize(x, *, fused_max_bytes=_FUSED_MAX_BYTES):
    x = jnp.asarray(x, jnp.float32)
    orig_shape = x.shape
    n = x.size

    flat = x.reshape(-1)
    # Pad (edge value, so min/max are unaffected) only when the size is not
    # already a multiple of one (8, 128) tile.  This branch is compile-time.
    pad = (-n) % _BLOCK_ELEMS
    if pad:
        flat = jnp.concatenate([flat, jnp.full((pad,), flat[-1], flat.dtype)])
    rows = flat.size // _LANES
    slab = flat.reshape(rows, _LANES)

    slab_bytes = slab.size * 4

    if slab_bytes <= fused_max_bytes:
        # ---- fused single-pass: one launch, 2N HBM traffic -----------------
        out_slab = pl.pallas_call(
            _fused_kernel,
            out_shape=jax.ShapeDtypeStruct(slab.shape, jnp.float32),
            compiler_params=pltpu.CompilerParams(
                vmem_limit_bytes=32 * 1024 * 1024),
        )(slab)
        return out_slab.reshape(-1)[:n].reshape(orig_shape)

    # ---- two-pass path for large inputs ------------------------------------
    tile_rows = _pick_tile_rows(rows)
    n_tiles = rows // tile_rows
    # Leading "parallel" axis of size 2 lets both v7x TensorCores reduce.
    num_splits = 2 if (n_tiles >= 2 and n_tiles % 2 == 0) else 1
    tiles_per_split = n_tiles // num_splits

    # Pass 1: per-split vector min/max partials (VMEM-resident accumulators).
    min_part, max_part = pl.pallas_call(
        _minmax_kernel,
        out_shape=(
            jax.ShapeDtypeStruct((num_splits, _SUBLANES, _LANES), jnp.float32),
            jax.ShapeDtypeStruct((num_splits, _SUBLANES, _LANES), jnp.float32),
        ),
        grid_spec=pltpu.PrefetchScalarGridSpec(
            num_scalar_prefetch=0,
            grid=(num_splits, tiles_per_split),
            in_specs=[pl.BlockSpec(
                (tile_rows, _LANES),
                lambda c, i: (c * tiles_per_split + i, 0))],
            out_specs=(
                pl.BlockSpec((1, _SUBLANES, _LANES), lambda c, i: (c, 0, 0)),
                pl.BlockSpec((1, _SUBLANES, _LANES), lambda c, i: (c, 0, 0)),
            ),
        ),
        compiler_params=pltpu.CompilerParams(
            dimension_semantics=("parallel", "arbitrary")),
    )(slab)

    # Final cross-lane reduce + scale precompute: tiny, done once outside.
    mn = jnp.min(min_part)
    rng = jnp.max(max_part) - mn
    scale = jnp.where(rng > 0.0, 1.0 / rng, 0.0)
    ms = jnp.stack([mn, scale]).astype(jnp.float32)           # shape (2,)

    # Pass 2: elementwise normalize, big lane-dense tiles, scalars from SMEM.
    out_slab = pl.pallas_call(
        _normalize_kernel,
        out_shape=jax.ShapeDtypeStruct(slab.shape, jnp.float32),
        grid_spec=pltpu.PrefetchScalarGridSpec(
            num_scalar_prefetch=0,
            grid=(n_tiles,),
            in_specs=[
                pl.BlockSpec((2,), lambda i: (0,), memory_space=pltpu.SMEM),
                pl.BlockSpec((tile_rows, _LANES), lambda i: (i, 0)),
            ],
            out_specs=pl.BlockSpec((tile_rows, _LANES), lambda i: (i, 0)),
        ),
        compiler_params=pltpu.CompilerParams(
            dimension_semantics=("parallel",)),
    )(ms, slab)

    return out_slab.reshape(-1)[:n].reshape(orig_shape)


class Normalize:
    """JAX/Pallas equivalent of the PyTorch `Normalize` module."""

    def __call__(self, tracks):
        vector = jnp.asarray(tracks[0], jnp.float32)
        normalised = _minmax_normalize(vector)
        tracks.insert(0, normalised)
        return tracks


if __name__ == "__main__":
    key = jax.random.PRNGKey(0)
    # NCHW-like input for tracks[0] (batch=2, channels=4, spatial=16x16).
    x = jax.random.normal(key, (2, 4, 16, 16), dtype=jnp.float32) * 3.0 + 1.5
    other = jax.random.normal(jax.random.fold_in(key, 1), (2, 4, 16, 16),
                              dtype=jnp.float32)

    def _ref(v):
        v = jnp.asarray(v, jnp.float32)
        mn = jnp.min(v)
        rng = jnp.max(v) - mn
        return jnp.where(rng > 0, (v - mn) / rng, jnp.zeros_like(v))

    tracks = [x, other]
    module = Normalize()
    tracks = module(tracks)
    out = jax.block_until_ready(tracks[0])

    assert out.shape == x.shape and out.dtype == jnp.float32
    assert jnp.allclose(out, _ref(x), atol=1e-6, rtol=1e-6)
    assert len(tracks) == 3  # normalised inserted at front, originals kept

    # Degenerate case: constant tensor -> zeros (range_v == 0 branch).
    const = jnp.full((2, 4, 16, 16), 7.0, dtype=jnp.float32)
    out_const = jax.block_until_ready(_minmax_normalize(const))
    assert jnp.allclose(out_const, jnp.zeros_like(const))

    # Non-tile-aligned shape exercises the edge-value padding path.
    odd = jax.random.normal(jax.random.fold_in(key, 2), (3, 5, 7),
                            dtype=jnp.float32)
    out_odd = jax.block_until_ready(_minmax_normalize(odd))
    assert jnp.allclose(out_odd, _ref(odd), atol=1e-6, rtol=1e-6)

    # Force the tiled two-pass path (the large-input code path) on a modest
    # 2 MiB tensor so both kernels are exercised: grid (2 splits, 2 tiles).
    big = jax.random.normal(jax.random.fold_in(key, 3), (4, 8, 128, 128),
                            dtype=jnp.float32) * 2.0 - 0.3
    out_big = jax.block_until_ready(_minmax_normalize(big, fused_max_bytes=0))
    assert jnp.allclose(out_big, _ref(big), atol=1e-6, rtol=1e-6)

    print("KERNEL_OK")
</pallas_src>

<mosaic_0001>
module attributes {stable_mosaic.version = 11 : i64} {
  func.func @_fused_kernel(%arg0: memref<16x128xf32, #tpu.memory_space<vmem>>, %arg1: memref<16x128xf32, #tpu.memory_space<vmem>>) attributes {dimension_semantics = [], scalar_prefetch = 0 : i64, scratch_operands = 0 : i64, tpu.core_type = #tpu.core_type<tc>} {
    %c0 = arith.constant 0 : index
    %c0_0 = arith.constant 0 : index
    %0 = vector.load %arg0[%c0, %c0_0] : memref<16x128xf32, #tpu.memory_space<vmem>>, vector<16x128xf32>
    %1 = vector.shape_cast %0 : vector<16x128xf32> to vector<1x16x128xf32>
    %cst = arith.constant dense<0x7F800000> : vector<1xf32>
    %2 = vector.multi_reduction <minimumf>, %1, %cst [1, 2] : vector<1x16x128xf32> to vector<1xf32>
    %3 = vector.shape_cast %2 : vector<1xf32> to vector<1x1x1xf32>
    %4 = vector.extract %3[0, 0, 0] : f32 from vector<1x1x1xf32>
    %5 = vector.shape_cast %0 : vector<16x128xf32> to vector<1x16x128xf32>
    %cst_1 = arith.constant dense<0xFF800000> : vector<1xf32>
    %6 = vector.multi_reduction <maximumf>, %5, %cst_1 [1, 2] : vector<1x16x128xf32> to vector<1xf32>
    %7 = vector.shape_cast %6 : vector<1xf32> to vector<1x1x1xf32>
    %8 = vector.extract %7[0, 0, 0] : f32 from vector<1x1x1xf32>
    %9 = arith.subf %8, %4 : f32
    %cst_2 = arith.constant 0.000000e+00 : f32
    %10 = arith.cmpf ogt, %9, %cst_2 : f32
    %cst_3 = arith.constant 1.000000e+00 : f32
    %11 = arith.divf %cst_3, %9 : f32
    %cst_4 = arith.constant 0.000000e+00 : f32
    %12 = arith.select %10, %11, %cst_4 : f32
    %13 = vector.broadcast %4 : f32 to vector<16x128xf32>
    %14 = arith.subf %0, %13 : vector<16x128xf32>
    %15 = vector.broadcast %12 : f32 to vector<16x128xf32>
    %16 = arith.mulf %14, %15 : vector<16x128xf32>
    %c0_5 = arith.constant 0 : index
    %c0_6 = arith.constant 0 : index
    %17 = vector.load %arg1[%c0_5, %c0_6] : memref<16x128xf32, #tpu.memory_space<vmem>>, vector<16x128xf32>
    tpu.vector_store %arg1[%c0_5, %c0_6], %16 {strides = array<i32>} : memref<16x128xf32, #tpu.memory_space<vmem>>, vector<16x128xf32>,
    return
  }
}

</mosaic_0001>

<llo_original>
// kernel: _minmax_normalize.1
$region0: #{_minmax_normalize.1}
  #allocation0 [shape = 'u32[]', space=smem, size = 0x4, offset = 0x4, fixed_abs, tag = 'smem constant byte address 0x4 - core index']
  #allocation1 [shape = 'u32[144,128]{1,0:T(1,128)}', space=vmem, size = 0x12000, scoped, tag = 'internal scratch']
  %s0 = inlined_call_operand.vmem [shape: f32[16,128], index: 0, kind: input, shape index: {}]
  %s1 = inlined_call_operand.vmem [shape: f32[16,128], index: 1, kind: output, shape index: {}]
  %s2 = sld [smem:[#allocation0]]
  $region14: #{_minmax_normalize.1} parent=0
    _
  %s4 = ssub.s32 1, %s2
  %s5 = scalar_select 0, %s4, %s2
  // Predicated region
  $region2: #{_minmax_normalize.1} parent=0 // pred_check
    _
  $region3: #{_minmax_normalize.1} parent=0 // pred_check_branch
    %7 = sbr.rel (0) target = $region5
  $region4: #{_minmax_normalize.1} parent=0 // pred_region
    _
  $region5: #{_minmax_normalize.1} parent=0 // pred_fallthru
    _
  %v8 = vld [vmem:[%s0] sm:$0xff]
  %v9 = vld [vmem:[%s0 + $0x8] sm:$0xff]
  %v10 = vmin.f32 %v8, %v9
  %11 = vmin.xlane.f32.xlu0 %v10
  %v12 = vpop.xlane.xlu0 %11
  %v13 = vrot.slane %v12, 4
  %v14 = vmin.f32 %v12, %v13
  %v15 = vrot.slane %v14, 2
  %v16 = vmin.f32 %v14, %v15
  %v17 = vrot.slane %v16, 1
  %v18 = vmin.f32 %v16, %v17
  %s19 = vtos %v18
  %v20 = vmax.f32 %v8, %v9
  %21 = vmax.xlane.f32.xlu0 %v20
  %v22 = vpop.xlane.xlu0 %21
  %v23 = vrot.slane %v22, 4
  %v24 = vmax.f32 %v22, %v23
  %v25 = vrot.slane %v24, 2
  %v26 = vmax.f32 %v24, %v25
  %v27 = vrot.slane %v26, 1
  %v28 = vmax.f32 %v26, %v27
  %s29 = vtos %v28
  %s30 = ssub.f32 %s29, %s19
  %p31 = scmp.gt.f32.partialorder %s30, 0.0
  %v32 = vstv %s30
  %v33 = vrcp.pop %v32
  %s34 = vtos %v33
  %s35 = scalar_select %p31, %s34, 0.0
  %v36 = vstv %s19
  %v37 = vsub.f32 %v8, %v36
  %v38 = vsub.f32 %v9, %v36
  %v39 = vstv %s35
  %v40 = vmul.f32 %v37, %v39
  %v41 = vmul.f32 %v38, %v39
  %42 = vst [vmem:[%s1] sm:$0xff] %v40
  %43 = vst [vmem:[%s1 + $0x8] sm:$0xff] %v41
  // Predicated region
  $region6: #{_minmax_normalize.1} parent=0 // pred_check
    _
  $region7: #{_minmax_normalize.1} parent=0 // pred_check_branch
    %45 = sbr.rel (0) target = $region9
  $region8: #{_minmax_normalize.1} parent=0 // pred_region
    _
  $region9: #{_minmax_normalize.1} parent=0 // pred_fallthru
    _
  // Predicated region
  $region10: #{_minmax_normalize.1} parent=0 // pred_check
    _
  $region11: #{_minmax_normalize.1} parent=0 // pred_check_branch
    %47 = sbr.rel (0) target = $region13
  $region12: #{_minmax_normalize.1} parent=0 // pred_region
    _
  $region13: #{_minmax_normalize.1} parent=0 // pred_fallthru
    _

</llo_original>
